<compile_context>
chip_gen: v6e
topology: v6e:2x2x1
jax: 0.10.0
libtpu: 0.0.40
codegen_flags: <defaults>
</compile_context>

<pallas_src>
import functools

import jax
import jax.numpy as jnp
from jax.experimental import pallas as pl
from jax.experimental.pallas import tpu as pltpu

_HIDDEN = 128   # fixed by the module: fc1 out / fc2 in


def _mlp_kernel(x_ref, w1_ref, b1_ref, w2_ref, b2_ref, out_ref):
    # fc1 + ReLU (MXU matmul, f32 accumulate; ReLU on the VPU)
    h = jnp.dot(x_ref[...], w1_ref[...], preferred_element_type=jnp.float32)
    h = jnp.maximum(h + b1_ref[...], 0.0)           # (B, 128) + (1, 128)
    # fc2
    o = jnp.dot(h, w2_ref[...], preferred_element_type=jnp.float32)
    out_ref[...] = (o + b2_ref[...]).astype(out_ref.dtype)


def _round_up(n, m):
    return ((n + m - 1) // m) * m


@functools.partial(jax.jit, static_argnames=("block_batch", "grid_threshold"))
def network_forward(x, w1, b1, w2, b2, *, block_batch=2048, grid_threshold=256):
    """Pallas equivalent of Network.forward.

    x : (batch, in_features) float32
    w1: (in_features, 128)   float32   (transpose of torch fc1.weight)
    b1: (1, 128)             float32
    w2: (128, num_actions)   float32   (transpose of torch fc2.weight)
    b2: (1, num_actions)     float32
    returns (batch, num_actions) float32
    """
    batch, in_features = x.shape
    hidden = w1.shape[1]
    num_actions = w2.shape[1]
    assert hidden == _HIDDEN, "hidden width is fixed to 128 by the module"
    assert w2.shape[0] == hidden and b1.shape == (1, hidden)
    assert b2.shape == (1, num_actions)

    # Cost estimate from the *actual* (unpadded) shapes.
    cost = pl.CostEstimate(
        flops=2 * batch * (in_features * hidden + hidden * num_actions),
        transcendentals=0,
        bytes_accessed=4 * (batch * in_features + in_features * hidden + hidden
                            + hidden * num_actions + num_actions
                            + batch * num_actions),
    )
    out_shape = jax.ShapeDtypeStruct((batch, num_actions), jnp.float32)

    if batch <= grid_threshold:
        # Small / latency-bound batches: no grid, no pipeline machinery.
        # Whole operands live in VMEM for the single kernel invocation, and
        # there are zero wrapper-side XLA ops (no pads, no slices).
        vmem = pl.BlockSpec(memory_space=pltpu.MemorySpace.VMEM)
        return pl.pallas_call(
            _mlp_kernel,
            out_shape=out_shape,
            in_specs=[vmem, vmem, vmem, vmem, vmem],
            out_specs=vmem,
            cost_estimate=cost,
        )(x, w1, b1, w2, b2)

    # Large batches: tile only the batch axis; weights/biases stay resident
    # (constant index_map).  Pick the tile so there are always >= 2 tiles
    # (v7x megacore can shard them), tile rows a multiple of 8 (sublane),
    # capped at block_batch.  A partial last tile is fine: this is a purely
    # per-row computation and Pallas masks the out-of-range output rows.
    tb = min(block_batch, _round_up(pl.cdiv(batch, 2), 8))
    grid = pl.cdiv(batch, tb)

    return pl.pallas_call(
        _mlp_kernel,
        out_shape=out_shape,
        grid=(grid,),
        in_specs=[
            pl.BlockSpec((tb, in_features), lambda i: (i, 0)),
            pl.BlockSpec((in_features, hidden), lambda i: (0, 0)),
            pl.BlockSpec((1, hidden), lambda i: (0, 0)),
            pl.BlockSpec((hidden, num_actions), lambda i: (0, 0)),
            pl.BlockSpec((1, num_actions), lambda i: (0, 0)),
        ],
        out_specs=pl.BlockSpec((tb, num_actions), lambda i: (i, 0)),
        compiler_params=pltpu.CompilerParams(
            dimension_semantics=("parallel",)
        ),
        cost_estimate=cost,
    )(x, w1, b1, w2, b2)


# ----------------------------------------------------------------------------
# One-time parameter preparation (hoisted out of the forward pass).
# ----------------------------------------------------------------------------

def prepare_params_from_torch_layout(w1_t, b1_t, w2_t, b2_t):
    """Convert PyTorch nn.Linear layout ((out,in) weight, (out,) bias) to the
    kernel layout ((in,out) weight, (1,out) bias).  Run once, outside forward."""
    return (jnp.asarray(w1_t).T, jnp.asarray(b1_t).reshape(1, -1),
            jnp.asarray(w2_t).T, jnp.asarray(b2_t).reshape(1, -1))


def init_params(key, in_features, hidden, num_actions):
    """Deterministic init matching nn.Linear's default U(-1/sqrt(fan_in), 1/sqrt(fan_in)),
    produced directly in the kernel layout (no per-call reshaping needed)."""
    k1, k2, k3, k4 = jax.random.split(key, 4)
    bound1 = 1.0 / jnp.sqrt(in_features)
    bound2 = 1.0 / jnp.sqrt(hidden)
    w1 = jax.random.uniform(k1, (in_features, hidden), jnp.float32, -bound1, bound1)
    b1 = jax.random.uniform(k2, (1, hidden), jnp.float32, -bound1, bound1)
    w2 = jax.random.uniform(k3, (hidden, num_actions), jnp.float32, -bound2, bound2)
    b2 = jax.random.uniform(k4, (1, num_actions), jnp.float32, -bound2, bound2)
    return w1, b1, w2, b2


if __name__ == "__main__":
    # CartPole-style dims: observation dim 4, 2 actions, hidden 128 (fixed by module).
    in_features, hidden, num_actions = 4, 128, 2

    key = jax.random.PRNGKey(0)
    kx, kx2, kp = jax.random.split(key, 3)
    w1, b1, w2, b2 = init_params(kp, in_features, hidden, num_actions)

    def ref_forward(x):
        return jnp.maximum(x @ w1 + b1, 0.0) @ w2 + b2

    # --- small batch: gridless, whole-operands-in-VMEM path ----------------
    batch = 8
    x = jax.random.normal(kx, (batch, in_features), jnp.float32)
    out = network_forward(x, w1, b1, w2, b2)
    jax.block_until_ready(out)
    assert out.shape == (batch, num_actions)
    assert jnp.allclose(out, ref_forward(x), atol=1e-5, rtol=1e-5)

    # --- large batch: batch-tiled grid path (>= 2 tiles, weights resident) -
    big_batch = 640
    xb = jax.random.normal(kx2, (big_batch, in_features), jnp.float32)
    out_b = network_forward(xb, w1, b1, w2, b2)
    jax.block_until_ready(out_b)
    assert out_b.shape == (big_batch, num_actions)
    assert jnp.allclose(out_b, ref_forward(xb), atol=1e-5, rtol=1e-5)

    print("KERNEL_OK")
</pallas_src>

<mosaic_0001>
module attributes {stable_mosaic.version = 11 : i64} {
  func.func @_mlp_kernel(%arg0: memref<8x4xf32, #tpu.memory_space<vmem>>, %arg1: memref<4x128xf32, #tpu.memory_space<vmem>>, %arg2: memref<1x128xf32, #tpu.memory_space<vmem>>, %arg3: memref<128x2xf32, #tpu.memory_space<vmem>>, %arg4: memref<1x2xf32, #tpu.memory_space<vmem>>, %arg5: memref<8x2xf32, #tpu.memory_space<vmem>>) attributes {dimension_semantics = [], scalar_prefetch = 0 : i64, scratch_operands = 0 : i64, tpu.core_type = #tpu.core_type<tc>} {
    %c0 = arith.constant 0 : index
    %c0_0 = arith.constant 0 : index
    %0 = vector.load %arg0[%c0, %c0_0] : memref<8x4xf32, #tpu.memory_space<vmem>>, vector<8x4xf32>
    %c0_1 = arith.constant 0 : index
    %c0_2 = arith.constant 0 : index
    %1 = vector.load %arg1[%c0_1, %c0_2] : memref<4x128xf32, #tpu.memory_space<vmem>>, vector<4x128xf32>
    %cst = arith.constant dense<0.000000e+00> : vector<8x128xf32>
    %2 = tpu.matmul %0, %1, %cst {dimension_numbers = #tpu.dot_dimension_numbers<[1], [0], [0], [1], [0, 0, 1, 1], [], []>} : vector<8x4xf32>, vector<4x128xf32>, vector<8x128xf32> -> vector<8x128xf32>
    %c0_3 = arith.constant 0 : index
    %c0_4 = arith.constant 0 : index
    %3 = vector.load %arg2[%c0_3, %c0_4] : memref<1x128xf32, #tpu.memory_space<vmem>>, vector<1x128xf32>
    %4 = vector.broadcast %3 : vector<1x128xf32> to vector<8x128xf32>
    %5 = arith.addf %2, %4 : vector<8x128xf32>
    %cst_5 = arith.constant 0.000000e+00 : f32
    %6 = vector.broadcast %cst_5 : f32 to vector<8x128xf32>
    %7 = arith.maximumf %5, %6 : vector<8x128xf32>
    %c0_6 = arith.constant 0 : index
    %c0_7 = arith.constant 0 : index
    %8 = vector.load %arg3[%c0_6, %c0_7] : memref<128x2xf32, #tpu.memory_space<vmem>>, vector<128x2xf32>
    %cst_8 = arith.constant dense<0.000000e+00> : vector<8x2xf32>
    %9 = tpu.matmul %7, %8, %cst_8 {dimension_numbers = #tpu.dot_dimension_numbers<[1], [0], [0], [1], [0, 0, 1, 1], [], []>} : vector<8x128xf32>, vector<128x2xf32>, vector<8x2xf32> -> vector<8x2xf32>
    %c0_9 = arith.constant 0 : index
    %c0_10 = arith.constant 0 : index
    %10 = vector.load %arg4[%c0_9, %c0_10] : memref<1x2xf32, #tpu.memory_space<vmem>>, vector<1x2xf32>
    %11 = vector.broadcast %10 : vector<1x2xf32> to vector<8x2xf32>
    %12 = arith.addf %9, %11 : vector<8x2xf32>
    %c0_11 = arith.constant 0 : index
    %c0_12 = arith.constant 0 : index
    %13 = vector.load %arg5[%c0_11, %c0_12] : memref<8x2xf32, #tpu.memory_space<vmem>>, vector<8x2xf32>
    tpu.vector_store %arg5[%c0_11, %c0_12], %12 {strides = array<i32>} : memref<8x2xf32, #tpu.memory_space<vmem>>, vector<8x2xf32>,
    return
  }
}

</mosaic_0001>

<llo_original>
// kernel: network_forward.1
$region0: #{network_forward.1}
  #allocation0 [shape = 'u32[]', space=smem, size = 0x4, offset = 0x4, fixed_abs, tag = 'smem constant byte address 0x4 - core index']
  #allocation1 [shape = 'u32[144,128]{1,0:T(1,128)}', space=vmem, size = 0x12000, scoped, tag = 'internal scratch']
  %s0 = inlined_call_operand.vmem [shape: f32[8,4], index: 0, kind: input, shape index: {}]
  %s1 = inlined_call_operand.vmem [shape: f32[4,128], index: 1, kind: input, shape index: {}]
  %s2 = inlined_call_operand.vmem [shape: f32[1,128], index: 2, kind: input, shape index: {}]
  %s3 = inlined_call_operand.vmem [shape: f32[128,2], index: 3, kind: input, shape index: {}]
  %s4 = inlined_call_operand.vmem [shape: f32[1,2], index: 4, kind: input, shape index: {}]
  %s5 = inlined_call_operand.vmem [shape: f32[8,2], index: 5, kind: output, shape index: {}]
  %s6 = sld [smem:[#allocation0]]
  $region30: #{network_forward.1} parent=0
    _
  %s8 = ssub.s32 1, %s6
  %s9 = scalar_select 0, %s8, %s6
  // Predicated region
  $region2: #{network_forward.1} parent=0 // pred_check
    _
  $region3: #{network_forward.1} parent=0 // pred_check_branch
    %11 = sbr.rel (0) target = $region5
  $region4: #{network_forward.1} parent=0 // pred_region
    _
  $region5: #{network_forward.1} parent=0 // pred_fallthru
    _
  // Predicated region
  $region6: #{network_forward.1} parent=0 // pred_check
    _
  $region7: #{network_forward.1} parent=0 // pred_check_branch
    %13 = sbr.rel (0) target = $region9
  $region8: #{network_forward.1} parent=0 // pred_region
    _
  $region9: #{network_forward.1} parent=0 // pred_fallthru
    _
  // Predicated region
  $region10: #{network_forward.1} parent=0 // pred_check
    _
  $region11: #{network_forward.1} parent=0 // pred_check_branch
    %15 = sbr.rel (0) target = $region13
  $region12: #{network_forward.1} parent=0 // pred_region
    _
  $region13: #{network_forward.1} parent=0 // pred_fallthru
    _
  // Predicated region
  $region14: #{network_forward.1} parent=0 // pred_check
    _
  $region15: #{network_forward.1} parent=0 // pred_check_branch
    %17 = sbr.rel (0) target = $region17
  $region16: #{network_forward.1} parent=0 // pred_region
    _
  $region17: #{network_forward.1} parent=0 // pred_fallthru
    _
  // Predicated region
  $region18: #{network_forward.1} parent=0 // pred_check
    _
  $region19: #{network_forward.1} parent=0 // pred_check_branch
    %19 = sbr.rel (0) target = $region21
  $region20: #{network_forward.1} parent=0 // pred_region
    _
  $region21: #{network_forward.1} parent=0 // pred_fallthru
    _
  %v20 = vld [vmem:[%s0] sm:$0xff]
  %v21 = vld [vmem:[%s1] sm:$0xf]
  %v22 = vld [vmem:[%s2] sm:$0x1]
  %v24 = vlaneseq
  %v25 = vshrl.u32 %v24, 7
  %v26 = vsub.s32 0, %v25
  %v27 = vrot.slane %v22, %v26
  %vm29 = vcmask 31744
  %v31 = vsel %vm29, %v20, 0
  %vm33 = vcmask 1043456
  %v35 = vsel %vm33, %v21, 0
  %37 = vmatprep.subr.mxu0 0.0
  %38 = vmatpush1.msra.mxu0 0.0
  %39 = vmatprep.subr.mxu0 0.0
  %40 = vmatpush1.msra.mxu0 0.0
  %41 = vmatprep.subr.mxu0 0.0
  %42 = vmatpush1.msra.mxu0 0.0
  %43 = vmatprep.subr.mxu0 0.0
  %44 = vmatpush1.msra.mxu0 0.0
  %45 = vmatprep.subr.mxu0 0.0
  %46 = vmatpush1.msra.mxu0 0.0
  %47 = vmatprep.subr.mxu0 0.0
  %48 = vmatpush1.msra.mxu0 0.0
  %49 = vmatprep.subr.mxu0 0.0
  %50 = vmatpush1.msra.mxu0 0.0
  %51 = vmatprep.subr.mxu0 0.0
  %52 = vmatpush1.msra.mxu0 0.0
  %53 = vmatprep.subr.mxu0 0.0
  %54 = vmatpush1.msra.mxu0 0.0
  %55 = vmatprep.subr.mxu0 0.0
  %56 = vmatpush1.msra.mxu0 0.0
  %57 = vmatprep.subr.mxu0 0.0
  %58 = vmatpush1.msra.mxu0 0.0
  %59 = vmatprep.subr.mxu0 0.0
  %60 = vmatpush1.msra.mxu0 0.0
  %61 = vmatprep.subr.mxu0 0.0
  %62 = vmatpush1.msra.mxu0 0.0
  %63 = vmatprep.subr.mxu0 0.0
  %64 = vmatpush1.msra.mxu0 0.0
  %65 = vmatprep.subr.mxu0 0.0
  %66 = vmatpush1.msra.mxu0 0.0
  %67 = vmatprep.subr.mxu0 0.0
  %68 = vmatpush1.msra.mxu0 %v35
  %69 = vmatprep.subr.mxu0 0.0
  %70 = vmatpush2.msra.mxu0 0.0
  %71 = vmatprep.subr.mxu0 0.0
  %72 = vmatpush2.msra.mxu0 0.0
  %73 = vmatprep.subr.mxu0 0.0
  %74 = vmatpush2.msra.mxu0 0.0
  %75 = vmatprep.subr.mxu0 0.0
  %76 = vmatpush2.msra.mxu0 0.0
  %77 = vmatprep.subr.mxu0 0.0
  %78 = vmatpush2.msra.mxu0 0.0
  %79 = vmatprep.subr.mxu0 0.0
  %80 = vmatpush2.msra.mxu0 0.0
  %81 = vmatprep.subr.mxu0 0.0
  %82 = vmatpush2.msra.mxu0 0.0
  %83 = vmatprep.subr.mxu0 0.0
  %84 = vmatpush2.msra.mxu0 0.0
  %85 = vmatprep.subr.mxu0 0.0
  %86 = vmatpush2.msra.mxu0 0.0
  %87 = vmatprep.subr.mxu0 0.0
  %88 = vmatpush2.msra.mxu0 0.0
  %89 = vmatprep.subr.mxu0 0.0
  %90 = vmatpush2.msra.mxu0 0.0
  %91 = vmatprep.subr.mxu0 0.0
  %92 = vmatpush2.msra.mxu0 0.0
  %93 = vmatprep.subr.mxu0 0.0
  %94 = vmatpush2.msra.mxu0 0.0
  %95 = vmatprep.subr.mxu0 0.0
  %96 = vmatpush2.msra.mxu0 0.0
  %97 = vmatprep.subr.mxu0 0.0
  %98 = vmatpush2.msra.mxu0 0.0
  %99 = vmatprep.subr.mxu0 0.0
  %100 = vmatpush2.msra.mxu0 0.0
  %101 = vmatprep.mubr.f32.mxu0 0.0
  %102 = vmatmul.mubr.f32.gmra.mxu0 %v31
  %v103 = vpop.f32.mrf.mxu0
  %v104 = vadd.f32 %v27, %v103
  %v105 = vpop.f32.mrf.mxu0
  %106 = vdwg.mxu0
  %v107 = vmax.f32 %v104, 0.0
  %v108 = vld [vmem:[%s3] sm:$0xff]
  %v109 = vld [vmem:[%s3 + $0x8] sm:$0xff]
  %v110 = vld [vmem:[%s3 + $0x10] sm:$0xff]
  %v111 = vld [vmem:[%s3 + $0x18] sm:$0xff]
  %v112 = vld [vmem:[%s3 + $0x20] sm:$0xff]
  %v113 = vld [vmem:[%s3 + $0x28] sm:$0xff]
  %v114 = vld [vmem:[%s3 + $0x30] sm:$0xff]
  %v115 = vld [vmem:[%s3 + $0x38] sm:$0xff]
  %v116 = vld [vmem:[%s3 + $0x40] sm:$0xff]
  %v117 = vld [vmem:[%s3 + $0x48] sm:$0xff]
  %v118 = vld [vmem:[%s3 + $0x50] sm:$0xff]
  %v119 = vld [vmem:[%s3 + $0x58] sm:$0xff]
  %v120 = vld [vmem:[%s3 + $0x60] sm:$0xff]
  %v121 = vld [vmem:[%s3 + $0x68] sm:$0xff]
  %v122 = vld [vmem:[%s3 + $0x70] sm:$0xff]
  %v123 = vld [vmem:[%s3 + $0x78] sm:$0xff]
  %v124 = vld [vmem:[%s4] sm:$0x1]
  %v126 = vlaneseq
  %v127 = vshrl.u32 %v126, 7
  %v128 = vsub.s32 0, %v127
  %v129 = vrot.slane %v124, %v128
  %131 = vmatprep.subr.mxu0 0.0
  %132 = vmatpush1.msra.mxu0 %v123
  %133 = vmatprep.subr.mxu0 0.0
  %134 = vmatpush1.msra.mxu0 %v122
  %135 = vmatprep.subr.mxu0 0.0
  %136 = vmatpush1.msra.mxu0 %v121
  %137 = vmatprep.subr.mxu0 0.0
  %138 = vmatpush1.msra.mxu0 %v120
  %139 = vmatprep.subr.mxu0 0.0
  %140 = vmatpush1.msra.mxu0 %v119
  %141 = vmatprep.subr.mxu0 0.0
  %142 = vmatpush1.msra.mxu0 %v118
  %143 = vmatprep.subr.mxu0 0.0
  %144 = vmatpush1.msra.mxu0 %v117
  %145 = vmatprep.subr.mxu0 0.0
  %146 = vmatpush1.msra.mxu0 %v116
  %147 = vmatprep.subr.mxu0 0.0
  %148 = vmatpush1.msra.mxu0 %v115
  %149 = vmatprep.subr.mxu0 0.0
  %150 = vmatpush1.msra.mxu0 %v114
  %151 = vmatprep.subr.mxu0 0.0
  %152 = vmatpush1.msra.mxu0 %v113
  %153 = vmatprep.subr.mxu0 0.0
  %154 = vmatpush1.msra.mxu0 %v112
  %155 = vmatprep.subr.mxu0 0.0
  %156 = vmatpush1.msra.mxu0 %v111
  %157 = vmatprep.subr.mxu0 0.0
  %158 = vmatpush1.msra.mxu0 %v110
  %159 = vmatprep.subr.mxu0 0.0
  %160 = vmatpush1.msra.mxu0 %v109
  %161 = vmatprep.subr.mxu0 0.0
  %162 = vmatpush1.msra.mxu0 %v108
  %163 = vmatprep.subr.mxu0 0.0
  %164 = vmatpush2.msra.mxu0 0.0
  %165 = vmatprep.subr.mxu0 0.0
  %166 = vmatpush2.msra.mxu0 0.0
  %167 = vmatprep.subr.mxu0 0.0
  %168 = vmatpush2.msra.mxu0 0.0
  %169 = vmatprep.subr.mxu0 0.0
  %170 = vmatpush2.msra.mxu0 0.0
  %171 = vmatprep.subr.mxu0 0.0
  %172 = vmatpush2.msra.mxu0 0.0
  %173 = vmatprep.subr.mxu0 0.0
  %174 = vmatpush2.msra.mxu0 0.0
  %175 = vmatprep.subr.mxu0 0.0
  %176 = vmatpush2.msra.mxu0 0.0
  %177 = vmatprep.subr.mxu0 0.0
  %178 = vmatpush2.msra.mxu0 0.0
  %179 = vmatprep.subr.mxu0 0.0
  %180 = vmatpush2.msra.mxu0 0.0
  %181 = vmatprep.subr.mxu0 0.0
  %182 = vmatpush2.msra.mxu0 0.0
  %183 = vmatprep.subr.mxu0 0.0
  %184 = vmatpush2.msra.mxu0 0.0
  %185 = vmatprep.subr.mxu0 0.0
  %186 = vmatpush2.msra.mxu0 0.0
  %187 = vmatprep.subr.mxu0 0.0
  %188 = vmatpush2.msra.mxu0 0.0
  %189 = vmatprep.subr.mxu0 0.0
  %190 = vmatpush2.msra.mxu0 0.0
  %191 = vmatprep.subr.mxu0 0.0
  %192 = vmatpush2.msra.mxu0 0.0
  %193 = vmatprep.subr.mxu0 0.0
  %194 = vmatpush2.msra.mxu0 0.0
  %195 = vmatprep.mubr.f32.mxu0 0.0
  %196 = vmatmul.mubr.f32.gmra.mxu0 %v107
  %v197 = vpop.f32.mrf.mxu0
  %v198 = vadd.f32 %v129, %v197
  %v199 = vpop.f32.mrf.mxu0
  %200 = vdwg.mxu0
  %vm201 = vcmask 15360
  %202 = vst.msk [vmem:[%s5] sm:$0xff] %vm201, %v198
  // Predicated region
  $region22: #{network_forward.1} parent=0 // pred_check
    _
  $region23: #{network_forward.1} parent=0 // pred_check_branch
    %204 = sbr.rel (0) target = $region25
  $region24: #{network_forward.1} parent=0 // pred_region
    _
  $region25: #{network_forward.1} parent=0 // pred_fallthru
    _
  // Predicated region
  $region26: #{network_forward.1} parent=0 // pred_check
    _
  $region27: #{network_forward.1} parent=0 // pred_check_branch
    %206 = sbr.rel (0) target = $region29
  $region28: #{network_forward.1} parent=0 // pred_region
    _
  $region29: #{network_forward.1} parent=0 // pred_fallthru
    _

</llo_original>
